<compile_context>
chip_gen: v6e
topology: v6e:2x2x1
jax: 0.10.0
libtpu: 0.0.40
codegen_flags: <defaults>
</compile_context>

<pallas_src>
import math
from functools import partial

import jax
import jax.numpy as jnp
from jax.experimental import pallas as pl
from jax.experimental.pallas import tpu as pltpu


# ---------------------------------------------------------------------------
# TRLinear parameter setup (glue, plain JAX): tensor-ring cores -> dense weight
# ---------------------------------------------------------------------------
def make_tr_cores(key, input_size, output_size, r):
    """Cores G_t of shape (r, dim_t, r), ring over input_size + output_size."""
    dims = list(input_size) + list(output_size)
    n = len(dims)
    keys = jax.random.split(key, n)
    cores = []
    for t in range(n):
        shape = (r, dims[t], r)
        cores.append(
            jax.random.normal(keys[t], shape, jnp.float32)
            * (1.0 / math.sqrt(r * dims[t]))
        )
    return cores


def tr_dense_weight(cores, input_size, output_size):
    """W[i1,i2,i3,j1,j2,j3] = Trace(G1[:,i1,:] ... G6[:,j3,:]) -> (prod_in, prod_out).

    TODO(synk): a further (large) optimization would be to never materialize the
    dense W and contract through the small TR cores inside the kernel; kept dense
    (init-time only) to preserve the validated reference semantics.
    """
    g1, g2, g3, g4, g5, g6 = cores
    W = jnp.einsum("aib,bjc,ckd,dle,emf,fna->ijklmn", g1, g2, g3, g4, g5, g6)
    n_in = math.prod(input_size)
    n_out = math.prod(output_size)
    return W.reshape(n_in, n_out).astype(jnp.float32)


def bake_weight_layout(W, H, E, S, D, K):
    """Fold the module's data-layout permutes into W once (free at init):

    rows (h,e,s) -> (s,h,e): keys/values.reshape(B,-1) feeds the matmul directly,
        removing the per-call [B,S,H,E] -> [B,H,E,S] HBM transpose.
    cols (h,d,k) -> (h,k,d): the matmul output is [B,H,k,D] row-major (D in lanes),
        removing the per-call [B,H,D,k] -> [B,H,k,D] HBM transpose.
    """
    return (
        W.reshape(H, E, S, H, D, K)
        .transpose(2, 0, 1, 3, 5, 4)
        .reshape(H * E * S, H * D * K)
    )


# ---------------------------------------------------------------------------
# Tiling helpers
# ---------------------------------------------------------------------------
def _pick_tile(dim, preferred, align):
    """Largest tile <= preferred that divides `dim` and is a multiple of `align`;
    falls back to the full dim (block == full extent is always legal)."""
    if dim <= preferred:
        return dim
    t = (preferred // align) * align
    while t >= align:
        if dim % t == 0:
            return t
        t -= align
    return dim


def _pick_group(total, bytes_per_item, budget=2 * 1024 * 1024):
    """Largest divisor of `total` whose double-buffered footprint fits the budget."""
    best = 1
    for cand in range(1, total + 1):
        if total % cand == 0 and cand * bytes_per_item <= budget:
            best = cand
    return best


_VMEM_LIMIT = 32 * 1024 * 1024  # explicit scoped-VMEM limit; tiles sized well under it


# ---------------------------------------------------------------------------
# Fused K/V TR-projection: tiled (M, N, K) matmul pipeline, bf16 in, f32 acc
# ---------------------------------------------------------------------------
def _proj_fused_kernel(xk_ref, xv_ref, wk_ref, wv_ref, ok_ref, ov_ref,
                       acck_ref, accv_ref):
    # Grid = (N // tn, K // tk); reduction axis (K) is last / "arbitrary".
    @pl.when(pl.program_id(1) == 0)
    def _():
        acck_ref[...] = jnp.zeros_like(acck_ref)
        accv_ref[...] = jnp.zeros_like(accv_ref)

    acck_ref[...] += jnp.dot(xk_ref[...], wk_ref[...],
                             preferred_element_type=jnp.float32)
    accv_ref[...] += jnp.dot(xv_ref[...], wv_ref[...],
                             preferred_element_type=jnp.float32)

    # Output block index is constant across the reduction axis, so the block is
    # resident; only write it on the final step (saves per-step VMEM stores).
    @pl.when(pl.program_id(1) == pl.num_programs(1) - 1)
    def _():
        ok_ref[...] = acck_ref[...].astype(ok_ref.dtype)
        ov_ref[...] = accv_ref[...].astype(ov_ref.dtype)


def tr_project_fused(xk, xv, wk, wv, *, tk_pref=512, tn_pref=512):
    """(B, N_in) @ (N_in, N_out) for K and V in one pallas_call (shared pipeline)."""
    B, Kdim = xk.shape
    _, N = wk.shape
    tk = _pick_tile(Kdim, tk_pref, 128)  # lane dim of x / sublane dim of W
    tn = _pick_tile(N, tn_pref, 128)     # lane dim of W / output
    grid = (N // tn, Kdim // tk)

    flops = 2 * 2 * B * Kdim * N
    bytes_accessed = (2 * Kdim * N * wk.dtype.itemsize
                      + 2 * B * Kdim * xk.dtype.itemsize
                      + 2 * B * N * 4)

    return pl.pallas_call(
        _proj_fused_kernel,
        out_shape=(jax.ShapeDtypeStruct((B, N), jnp.float32),
                   jax.ShapeDtypeStruct((B, N), jnp.float32)),
        grid=grid,
        in_specs=[
            pl.BlockSpec((B, tk), lambda j, kk: (0, kk)),
            pl.BlockSpec((B, tk), lambda j, kk: (0, kk)),
            pl.BlockSpec((tk, tn), lambda j, kk: (kk, j)),
            pl.BlockSpec((tk, tn), lambda j, kk: (kk, j)),
        ],
        out_specs=(
            pl.BlockSpec((B, tn), lambda j, kk: (0, j)),
            pl.BlockSpec((B, tn), lambda j, kk: (0, j)),
        ),
        scratch_shapes=[pltpu.VMEM((B, tn), jnp.float32),
                        pltpu.VMEM((B, tn), jnp.float32)],
        compiler_params=pltpu.CompilerParams(
            dimension_semantics=("parallel", "arbitrary"),
            vmem_limit_bytes=_VMEM_LIMIT,
        ),
        cost_estimate=pl.CostEstimate(
            flops=flops, transcendentals=0, bytes_accessed=bytes_accessed),
    )(xk, xv, wk, wv)


# ---------------------------------------------------------------------------
# Attention: grid = (batch-groups, L-tiles); K/V resident across the L axis;
# heads unrolled statically and packed along lanes -> lane-dense output store.
# ---------------------------------------------------------------------------
def _attn_kernel(q_ref, k_ref, v_ref, o_ref, *, scale, n_heads):
    # q_ref: (GB, H, tl, E); k_ref/v_ref: (GB, H, Kp, D); o_ref: (GB, tl, H*D)
    qb = q_ref[...] * scale          # fold scale into q (smaller than the scores tile)
    kb = k_ref[...]
    vb = v_ref[...]
    outs = []
    for h in range(n_heads):         # static unroll; heads packed along the lane dim
        s = jax.lax.dot_general(
            qb[:, h], kb[:, h], (((2,), (2,)), ((0,), (0,))),
            preferred_element_type=jnp.float32)                      # (GB, tl, Kp)
        m = jnp.max(s, axis=-1, keepdims=True)
        p = jnp.exp(s - m)
        denom = jnp.sum(p, axis=-1, keepdims=True)
        a = p * pl.reciprocal(denom, approx=True)  # EUP reciprocal; dropout = identity (eval)
        outs.append(jax.lax.dot_general(
            a, vb[:, h], (((2,), (1,)), ((0,), (0,))),
            preferred_element_type=jnp.float32))                     # (GB, tl, D)
    o_ref[...] = jnp.concatenate(outs, axis=-1).astype(o_ref.dtype)  # (GB, tl, H*D)


def attention_pallas(q_bhle, k_bhkd, v_bhkd, scale):
    B, H, L, E = q_bhle.shape
    _, _, Kp, D = v_bhkd.shape
    tl = _pick_tile(L, 512, 8)       # L tile: multiple of 8 sublanes (or full extent)
    # f32, double-buffered footprint per batch element at one grid step
    per_b = 4 * (H * tl * E + 2 * H * Kp * D + tl * H * D) * 2
    GB = _pick_group(B, per_b)
    grid = (B // GB, L // tl)

    flops = 2 * B * H * L * Kp * (E + D)
    transcendentals = B * H * L * Kp
    bytes_accessed = 4 * (B * H * L * E + 2 * B * H * Kp * D + B * L * H * D)

    kernel = partial(_attn_kernel, scale=scale, n_heads=H)
    return pl.pallas_call(
        kernel,
        out_shape=jax.ShapeDtypeStruct((B, L, H * D), jnp.float32),
        grid=grid,
        in_specs=[
            pl.BlockSpec((GB, H, tl, E), lambda b, l: (b, 0, l, 0)),
            pl.BlockSpec((GB, H, Kp, D), lambda b, l: (b, 0, 0, 0)),  # resident over l
            pl.BlockSpec((GB, H, Kp, D), lambda b, l: (b, 0, 0, 0)),  # resident over l
        ],
        out_specs=pl.BlockSpec((GB, tl, H * D), lambda b, l: (b, l, 0)),
        compiler_params=pltpu.CompilerParams(
            dimension_semantics=("parallel", "parallel"),
            vmem_limit_bytes=_VMEM_LIMIT,
        ),
        cost_estimate=pl.CostEstimate(
            flops=flops, transcendentals=transcendentals,
            bytes_accessed=bytes_accessed),
    )(q_bhle, k_bhkd, v_bhkd)


# ---------------------------------------------------------------------------
# LinearAttention (functional re-implementation of the PyTorch module)
# ---------------------------------------------------------------------------
class LinearAttentionPallas:
    def __init__(self, seq_len, k, d_k, n_heads, r, mask_flag=False, scale=None,
                 key=None):
        # TODO(synk): mask_flag path omitted — upstream code applies proj_k (built
        # for [H, d_k, seq_len] inputs) to a [B,1,L,L] boolean mask and feeds the
        # float result to masked_fill_, which is shape/dtype-inconsistent.
        self.seq_len, self.k, self.d_k, self.n_heads, self.r = seq_len, k, d_k, n_heads, r
        self.scale = scale
        self.mask_flag = mask_flag
        key = key if key is not None else jax.random.PRNGKey(0)
        kk, kv = jax.random.split(key)
        input_size = [n_heads, d_k, seq_len]
        output_size = [n_heads, d_k, k]
        self.cores_k = make_tr_cores(kk, input_size, output_size, r)
        self.cores_v = make_tr_cores(kv, input_size, output_size, r)
        # Dense weights in the module's native (h,e,s)x(h,d,k) order (reference path).
        self.W_k_orig = tr_dense_weight(self.cores_k, input_size, output_size)
        self.W_v_orig = tr_dense_weight(self.cores_v, input_size, output_size)
        # Layout-baked + bf16 weights used by the kernels (f32 accumulation on MXU).
        self.W_k = bake_weight_layout(
            self.W_k_orig, n_heads, d_k, seq_len, d_k, k).astype(jnp.bfloat16)
        self.W_v = bake_weight_layout(
            self.W_v_orig, n_heads, d_k, seq_len, d_k, k).astype(jnp.bfloat16)

    def __call__(self, queries, keys, values, attn_mask=None):
        B, L, H, E = queries.shape
        _, S, _, D = values.shape
        scale = self.scale if self.scale is not None else 1.0 / math.sqrt(E)

        # No HBM transposes for keys/values: (s,h,e)/(h,k,d) orders are baked into W.
        k_flat = keys.reshape(B, -1).astype(jnp.bfloat16)
        v_flat = values.reshape(B, -1).astype(jnp.bfloat16)

        # Fused K/V TRLinear projection (tiled, pipelined Pallas matmul).
        k_proj, v_proj = tr_project_fused(k_flat, v_flat, self.W_k, self.W_v)
        k_proj = k_proj.reshape(B, H, self.k, D)   # free reshape: cols already (h,k,d)
        v_proj = v_proj.reshape(B, H, self.k, D)

        # Same permute the PyTorch module performs on queries.
        q = jnp.transpose(queries, (0, 2, 1, 3))   # [B,H,L,E]

        # Fused scores -> softmax -> weighted sum; output already [B, L, H*D].
        out = attention_pallas(q, k_proj, v_proj, scale)
        V = out.reshape(B, L, H, D)                # free reshape, no final transpose
        return V, None


# ---------------------------------------------------------------------------
# pure-JAX reference (follows the PyTorch dataflow; weights quantized like kernel)
# ---------------------------------------------------------------------------
def _reference(module, queries, keys, values):
    B, L, H, E = queries.shape
    _, S, _, D = values.shape
    scale = module.scale if module.scale is not None else 1.0 / math.sqrt(E)
    Wk = module.W_k_orig.astype(jnp.bfloat16).astype(jnp.float32)
    Wv = module.W_v_orig.astype(jnp.bfloat16).astype(jnp.float32)
    kq = keys.astype(jnp.bfloat16).astype(jnp.float32)
    vq = values.astype(jnp.bfloat16).astype(jnp.float32)
    k_flat = jnp.transpose(kq, (0, 2, 3, 1)).reshape(B, -1)
    v_flat = jnp.transpose(vq, (0, 2, 3, 1)).reshape(B, -1)
    k_proj = (k_flat @ Wk).reshape(B, H, D, module.k).transpose(0, 1, 3, 2)
    v_proj = (v_flat @ Wv).reshape(B, H, D, module.k).transpose(0, 1, 3, 2)
    q = jnp.transpose(queries, (0, 2, 1, 3))
    scores = jnp.einsum("bhld,bhkd->bhlk", q, k_proj)
    A = jax.nn.softmax(scale * scores, axis=-1)
    V = jnp.einsum("bhlk,bhkd->bhld", A, v_proj)
    return jnp.transpose(V, (0, 2, 1, 3))


if __name__ == "__main__":
    # small shapes: B=2, seq_len=L=S=8, n_heads=H=2, d_k=E=D=4, k=4, r=2
    B, L, H, E = 2, 8, 2, 4
    seq_len, k_dim, d_k, n_heads, r = L, 4, E, H, 2

    root = jax.random.PRNGKey(0)
    kp, kq, kk_, kv_ = jax.random.split(root, 4)

    module = LinearAttentionPallas(seq_len, k_dim, d_k, n_heads, r,
                                   mask_flag=False, key=kp)

    queries = jax.random.normal(kq, (B, L, H, E), jnp.float32)
    keys = jax.random.normal(kk_, (B, L, H, E), jnp.float32)
    values = jax.random.normal(kv_, (B, L, H, E), jnp.float32)

    V, _ = module(queries, keys, values, attn_mask=None)
    V = jax.block_until_ready(V)

    V_ref = _reference(module, queries, keys, values)
    assert V.shape == (B, L, H, E)
    # Tolerance covers the approx (EUP) reciprocal in the softmax denominator.
    err = float(jnp.max(jnp.abs(V - V_ref)))
    assert err < 5e-3, f"max abs err {err}"

    print("KERNEL_OK")
</pallas_src>

<mosaic_0001>
module attributes {stable_mosaic.version = 11 : i64} {
  func.func @_proj_fused_kernel(%arg0: i32, %arg1: i32, %arg2: memref<2x64xbf16, #tpu.memory_space<vmem>>, %arg3: memref<2x64xbf16, #tpu.memory_space<vmem>>, %arg4: memref<64x32xbf16, #tpu.memory_space<vmem>>, %arg5: memref<64x32xbf16, #tpu.memory_space<vmem>>, %arg6: memref<2x32xf32, #tpu.memory_space<vmem>>, %arg7: memref<2x32xf32, #tpu.memory_space<vmem>>, %arg8: memref<2x32xf32, #tpu.memory_space<vmem>>, %arg9: memref<2x32xf32, #tpu.memory_space<vmem>>) attributes {dimension_semantics = [#tpu.dimension_semantics<parallel>, #tpu.dimension_semantics<arbitrary>], iteration_bounds = array<i64: 1, 1>, scalar_prefetch = 0 : i64, scratch_operands = 2 : i64, tpu.core_type = #tpu.core_type<tc>, window_params = [{transform_indices = @transform_0, window_bounds = array<i64: 2, 64>}, {transform_indices = @transform_1, window_bounds = array<i64: 2, 64>}, {transform_indices = @transform_2, window_bounds = array<i64: 64, 32>}, {transform_indices = @transform_3, window_bounds = array<i64: 64, 32>}, {transform_indices = @transform_4, window_bounds = array<i64: 2, 32>}, {transform_indices = @transform_5, window_bounds = array<i64: 2, 32>}]} {
    %c0_i32 = arith.constant 0 : i32
    %0 = arith.cmpi eq, %arg1, %c0_i32 : i32
    %1 = arith.extui %0 : i1 to i32
    %c0_i32_0 = arith.constant 0 : i32
    %2 = arith.cmpi ne, %1, %c0_i32_0 : i32
    scf.if %2 {
      %cst_19 = arith.constant 0.000000e+00 : f32
      %18 = vector.broadcast %cst_19 : f32 to vector<2x32xf32>
      %c0_20 = arith.constant 0 : index
      %c0_21 = arith.constant 0 : index
      %19 = vector.load %arg8[%c0_20, %c0_21] : memref<2x32xf32, #tpu.memory_space<vmem>>, vector<2x32xf32>
      tpu.vector_store %arg8[%c0_20, %c0_21], %18 {strides = array<i32>} : memref<2x32xf32, #tpu.memory_space<vmem>>, vector<2x32xf32>,
      %cst_22 = arith.constant 0.000000e+00 : f32
      %20 = vector.broadcast %cst_22 : f32 to vector<2x32xf32>
      %c0_23 = arith.constant 0 : index
      %c0_24 = arith.constant 0 : index
      %21 = vector.load %arg9[%c0_23, %c0_24] : memref<2x32xf32, #tpu.memory_space<vmem>>, vector<2x32xf32>
      tpu.vector_store %arg9[%c0_23, %c0_24], %20 {strides = array<i32>} : memref<2x32xf32, #tpu.memory_space<vmem>>, vector<2x32xf32>,
    } else {
    }
    %c0 = arith.constant 0 : index
    %c0_1 = arith.constant 0 : index
    %3 = vector.load %arg8[%c0, %c0_1] : memref<2x32xf32, #tpu.memory_space<vmem>>, vector<2x32xf32>
    %c0_2 = arith.constant 0 : index
    %c0_3 = arith.constant 0 : index
    %4 = vector.load %arg2[%c0_2, %c0_3] : memref<2x64xbf16, #tpu.memory_space<vmem>>, vector<2x64xbf16>
    %c0_4 = arith.constant 0 : index
    %c0_5 = arith.constant 0 : index
    %5 = vector.load %arg4[%c0_4, %c0_5] : memref<64x32xbf16, #tpu.memory_space<vmem>>, vector<64x32xbf16>
    %cst = arith.constant dense<0.000000e+00> : vector<2x32xf32>
    %6 = tpu.matmul %4, %5, %cst {dimension_numbers = #tpu.dot_dimension_numbers<[1], [0], [0], [1], [0, 0, 1, 1], [], []>} : vector<2x64xbf16>, vector<64x32xbf16>, vector<2x32xf32> -> vector<2x32xf32>
    %7 = arith.addf %3, %6 : vector<2x32xf32>
    %c0_6 = arith.constant 0 : index
    %c0_7 = arith.constant 0 : index
    %8 = vector.load %arg8[%c0_6, %c0_7] : memref<2x32xf32, #tpu.memory_space<vmem>>, vector<2x32xf32>
    tpu.vector_store %arg8[%c0_6, %c0_7], %7 {strides = array<i32>} : memref<2x32xf32, #tpu.memory_space<vmem>>, vector<2x32xf32>,
    %c0_8 = arith.constant 0 : index
    %c0_9 = arith.constant 0 : index
    %9 = vector.load %arg9[%c0_8, %c0_9] : memref<2x32xf32, #tpu.memory_space<vmem>>, vector<2x32xf32>
    %c0_10 = arith.constant 0 : index
    %c0_11 = arith.constant 0 : index
    %10 = vector.load %arg3[%c0_10, %c0_11] : memref<2x64xbf16, #tpu.memory_space<vmem>>, vector<2x64xbf16>
    %c0_12 = arith.constant 0 : index
    %c0_13 = arith.constant 0 : index
    %11 = vector.load %arg5[%c0_12, %c0_13] : memref<64x32xbf16, #tpu.memory_space<vmem>>, vector<64x32xbf16>
    %cst_14 = arith.constant dense<0.000000e+00> : vector<2x32xf32>
    %12 = tpu.matmul %10, %11, %cst_14 {dimension_numbers = #tpu.dot_dimension_numbers<[1], [0], [0], [1], [0, 0, 1, 1], [], []>} : vector<2x64xbf16>, vector<64x32xbf16>, vector<2x32xf32> -> vector<2x32xf32>
    %13 = arith.addf %9, %12 : vector<2x32xf32>
    %c0_15 = arith.constant 0 : index
    %c0_16 = arith.constant 0 : index
    %14 = vector.load %arg9[%c0_15, %c0_16] : memref<2x32xf32, #tpu.memory_space<vmem>>, vector<2x32xf32>
    tpu.vector_store %arg9[%c0_15, %c0_16], %13 {strides = array<i32>} : memref<2x32xf32, #tpu.memory_space<vmem>>, vector<2x32xf32>,
    %c0_i32_17 = arith.constant 0 : i32
    %15 = arith.cmpi eq, %arg1, %c0_i32_17 : i32
    %16 = arith.extui %15 : i1 to i32
    %c0_i32_18 = arith.constant 0 : i32
    %17 = arith.cmpi ne, %16, %c0_i32_18 : i32
    scf.if %17 {
      %c0_19 = arith.constant 0 : index
      %c0_20 = arith.constant 0 : index
      %18 = vector.load %arg8[%c0_19, %c0_20] : memref<2x32xf32, #tpu.memory_space<vmem>>, vector<2x32xf32>
      %c0_21 = arith.constant 0 : index
      %c0_22 = arith.constant 0 : index
      %19 = vector.load %arg6[%c0_21, %c0_22] : memref<2x32xf32, #tpu.memory_space<vmem>>, vector<2x32xf32>
      tpu.vector_store %arg6[%c0_21, %c0_22], %18 {strides = array<i32>} : memref<2x32xf32, #tpu.memory_space<vmem>>, vector<2x32xf32>,
      %c0_23 = arith.constant 0 : index
      %c0_24 = arith.constant 0 : index
      %20 = vector.load %arg9[%c0_23, %c0_24] : memref<2x32xf32, #tpu.memory_space<vmem>>, vector<2x32xf32>
      %c0_25 = arith.constant 0 : index
      %c0_26 = arith.constant 0 : index
      %21 = vector.load %arg7[%c0_25, %c0_26] : memref<2x32xf32, #tpu.memory_space<vmem>>, vector<2x32xf32>
      tpu.vector_store %arg7[%c0_25, %c0_26], %20 {strides = array<i32>} : memref<2x32xf32, #tpu.memory_space<vmem>>, vector<2x32xf32>,
    } else {
    }
    return
  }
  func.func @transform_0(%arg0: i32, %arg1: i32) -> (i32, i32) {
    %c0_i32 = arith.constant 0 : i32
    %c0_i32_0 = arith.constant 0 : i32
    return %c0_i32, %arg1 : i32, i32
  }
  func.func @transform_1(%arg0: i32, %arg1: i32) -> (i32, i32) {
    %c0_i32 = arith.constant 0 : i32
    %c0_i32_0 = arith.constant 0 : i32
    return %c0_i32, %arg1 : i32, i32
  }
  func.func @transform_2(%arg0: i32, %arg1: i32) -> (i32, i32) {
    %c0_i32 = arith.constant 0 : i32
    return %arg1, %arg0 : i32, i32
  }
  func.func @transform_3(%arg0: i32, %arg1: i32) -> (i32, i32) {
    %c0_i32 = arith.constant 0 : i32
    return %arg1, %arg0 : i32, i32
  }
  func.func @transform_4(%arg0: i32, %arg1: i32) -> (i32, i32) {
    %c0_i32 = arith.constant 0 : i32
    %c0_i32_0 = arith.constant 0 : i32
    return %c0_i32, %arg0 : i32, i32
  }
  func.func @transform_5(%arg0: i32, %arg1: i32) -> (i32, i32) {
    %c0_i32 = arith.constant 0 : i32
    %c0_i32_0 = arith.constant 0 : i32
    return %c0_i32, %arg0 : i32, i32
  }
}

</mosaic_0001>

<llo_original>
// kernel: tpu_custom_call.1
$region0: #{tpu_custom_call.1}
  #allocation0 [shape = 'u32[]', space=smem, size = 0x4, offset = 0x4, fixed_abs, tag = 'smem constant byte address 0x4 - core index']
  #allocation1 [shape = 'u32[144,128]{1,0:T(1,128)}', space=vmem, size = 0x12000, scoped, tag = 'internal scratch']
  #allocation2 [shape = 'f32[2,32]{1,0:T(2,128)}', space=vmem, size = 0x400, scoped, tag = 'scratch operand']
  #allocation3 [shape = 'f32[2,32]{1,0:T(2,128)}', space=vmem, size = 0x400, scoped, tag = 'scratch operand']
  %s0 = inlined_call_operand.vmem [shape: bf16[2,64], index: 0, kind: input, shape index: {}]
  %s1 = inlined_call_operand.vmem [shape: bf16[2,64], index: 1, kind: input, shape index: {}]
  %s2 = inlined_call_operand.vmem [shape: bf16[64,32], index: 2, kind: input, shape index: {}]
  %s3 = inlined_call_operand.vmem [shape: bf16[64,32], index: 3, kind: input, shape index: {}]
  %s4 = inlined_call_operand.hbm [shape: f32[2,32], index: 4, kind: output, shape index: {0}]
  %s5 = inlined_call_operand.hbm [shape: f32[2,32], index: 5, kind: output, shape index: {1}]
  %6 = xla_tuple %s4, %s5
  %s7 = sld [smem:[#allocation0]]
  $region42: #{tpu_custom_call.1} parent=0
    _
  %s9 = ssub.s32 1, %s7
  %s10 = scalar_select 0, %s9, %s7
  $region1: #{tpu_custom_call.1} parent=0
    #allocation4 [shape = 'u8[1024]{0}', space=vmem, size = 0x400, scoped, tag = 'output window, operand 0, single buffered']
    #allocation5 [shape = 's32[1]{0}', space=sflag, size = 0x4, scoped, tag = 'scoped memory for tpu_custom_call.1']
    #allocation6 [shape = 'u8[1024]{0}', space=vmem, size = 0x400, scoped, tag = 'output window, operand 1, single buffered']
    #allocation7 [shape = 's32[1]{0}', space=sflag, size = 0x4, scoped, tag = 'scoped memory for tpu_custom_call.1']
    %11 = vsyncpa [#allocation5], 0
    %12 = vsyncpa [#allocation7], 0
    // Predicated region
    $region2: #{tpu_custom_call.1} parent=1 // pred_check
      _
    $region3: #{tpu_custom_call.1} parent=1 // pred_check_branch
      %14 = sbr.rel (0) target = $region5
    $region4: #{tpu_custom_call.1} parent=1 // pred_region
      _
    $region5: #{tpu_custom_call.1} parent=1 // pred_fallthru
      _
    // Predicated region
    $region6: #{tpu_custom_call.1} parent=1 // pred_check
      _
    $region7: #{tpu_custom_call.1} parent=1 // pred_check_branch
      %16 = sbr.rel (0) target = $region9
    $region8: #{tpu_custom_call.1} parent=1 // pred_region
      _
    $region9: #{tpu_custom_call.1} parent=1 // pred_fallthru
      _
    // Predicated region
    $region10: #{tpu_custom_call.1} parent=1 // pred_check
      _
    $region11: #{tpu_custom_call.1} parent=1 // pred_check_branch
      %18 = sbr.rel (0) target = $region13
    $region12: #{tpu_custom_call.1} parent=1 // pred_region
      _
    $region13: #{tpu_custom_call.1} parent=1 // pred_fallthru
      _
    // Predicated region
    $region14: #{tpu_custom_call.1} parent=1 // pred_check
      _
    $region15: #{tpu_custom_call.1} parent=1 // pred_check_branch
      %20 = sbr.rel (0) target = $region17
    $region16: #{tpu_custom_call.1} parent=1 // pred_region
      _
    $region17: #{tpu_custom_call.1} parent=1 // pred_fallthru
      _
    %p22 = scmp.eq.s32.totalorder 0, 0
    // Predicated region
    $region18: #{tpu_custom_call.1} parent=1 // pred_check
      %p23 = pneg %p22
    $region19: #{tpu_custom_call.1} parent=1 // pred_check_branch
      %25 = sbr.rel (%p23) target = $region21
    $region20: #{tpu_custom_call.1} parent=1 // pred_region
      %vm26 = vcmask 254976
      %27 = vst.msk [vmem:[#allocation2] sm:$0x3] %vm26, 0.0
      %28 = vst.msk [vmem:[#allocation3] sm:$0x3] %vm26, 0.0
    $region21: #{tpu_custom_call.1} parent=1 // pred_fallthru
      _
    %v29 = vld [vmem:[#allocation2] sm:$0x3]
    %v30 = vld [vmem:[%s0] sm:$0x1]
    %v31 = vld [vmem:[%s2] sm:$0xf]
    %v32 = vld [vmem:[%s2 + $0x4] sm:$0xf]
    %v33 = vld [vmem:[%s2 + $0x8] sm:$0xf]
    %v34 = vld [vmem:[%s2 + $0xc] sm:$0xf]
    %v35 = vld [vmem:[%s2 + $0x10] sm:$0xf]
    %v36 = vld [vmem:[%s2 + $0x14] sm:$0xf]
    %v37 = vld [vmem:[%s2 + $0x18] sm:$0xf]
    %v38 = vld [vmem:[%s2 + $0x1c] sm:$0xf]
    %v47 = vunpack.c.l.b16 %v31
    %v48 = vunpack.c.l.b16 %v32
    %v49 = vunpack.c.l.b16 %v33
    %v50 = vunpack.c.l.b16 %v34
    %v51 = vunpack.c.l.b16 %v35
    %v52 = vunpack.c.l.b16 %v36
    %v53 = vunpack.c.l.b16 %v37
    %v54 = vunpack.c.l.b16 %v38
    %v55 = vpack.c.b16 %v48, %v47
    %v56 = vpack.c.b16 %v50, %v49
    %v57 = vpack.c.b16 %v52, %v51
    %v58 = vpack.c.b16 %v54, %v53
    %vm63 = vcmask 523264
    %v65 = vsel %vm63, %v30, 0
    %67 = vmatprep.subr.bf16.mxu0 0
    %68 = vmatpush1.bf16.msra.mxu0 0
    %69 = vmatprep.subr.bf16.mxu0 0
    %70 = vmatpush1.bf16.msra.mxu0 0
    %71 = vmatprep.subr.bf16.mxu0 0
    %72 = vmatpush1.bf16.msra.mxu0 0
    %73 = vmatprep.subr.bf16.mxu0 0
    %74 = vmatpush1.bf16.msra.mxu0 0
    %75 = vmatprep.subr.bf16.mxu0 0
    %76 = vmatpush1.bf16.msra.mxu0 %v58
    %77 = vmatprep.subr.bf16.mxu0 0
    %78 = vmatpush1.bf16.msra.mxu0 %v57
    %79 = vmatprep.subr.bf16.mxu0 0
    %80 = vmatpush1.bf16.msra.mxu0 %v56
    %81 = vmatprep.subr.bf16.mxu0 0
    %82 = vmatpush1.bf16.msra.mxu0 %v55
    %83 = vmatprep.subr.bf16.mxu0 0
    %84 = vmatpush2.bf16.msra.mxu0 0
    %85 = vmatprep.subr.bf16.mxu0 0
    %86 = vmatpush2.bf16.msra.mxu0 0
    %87 = vmatprep.subr.bf16.mxu0 0
    %88 = vmatpush2.bf16.msra.mxu0 0
    %89 = vmatprep.subr.bf16.mxu0 0
    %90 = vmatpush2.bf16.msra.mxu0 0
    %91 = vmatprep.subr.bf16.mxu0 0
    %92 = vmatpush2.bf16.msra.mxu0 0
    %93 = vmatprep.subr.bf16.mxu0 0
    %94 = vmatpush2.bf16.msra.mxu0 0
    %95 = vmatprep.subr.bf16.mxu0 0
    %96 = vmatpush2.bf16.msra.mxu0 0
    %97 = vmatprep.subr.bf16.mxu0 0
    %98 = vmatpush2.bf16.msra.mxu0 0
    %99 = vmatprep.mubr.bf16.mxu0 0
    %100 = vmatmul.mubr.bf16.gmra.mxu0 %v65
    %v101 = vpop.f32.mrf.mxu0
    %v102 = vadd.f32 0.0, %v101
    %v103 = vpop.f32.mrf.mxu0
    %v104 = vpop.f32.mrf.mxu0
    %v105 = vpop.f32.mrf.mxu0
    %106 = vdwg.mxu0
    %v107 = vadd.f32 %v29, %v102
    %vm108 = vcmask 254976
    %109 = vst.msk [vmem:[#allocation2] sm:$0x3] %vm108, %v107
    %v110 = vld [vmem:[#allocation3] sm:$0x3]
    %v111 = vld [vmem:[%s1] sm:$0x1]
    %v112 = vld [vmem:[%s3] sm:$0xf]
    %v113 = vld [vmem:[%s3 + $0x4] sm:$0xf]
    %v114 = vld [vmem:[%s3 + $0x8] sm:$0xf]
    %v115 = vld [vmem:[%s3 + $0xc] sm:$0xf]
    %v116 = vld [vmem:[%s3 + $0x10] sm:$0xf]
    %v117 = vld [vmem:[%s3 + $0x14] sm:$0xf]
    %v118 = vld [vmem:[%s3 + $0x18] sm:$0xf]
    %v119 = vld [vmem:[%s3 + $0x1c] sm:$0xf]
    %v128 = vunpack.c.l.b16 %v112
    %v129 = vunpack.c.l.b16 %v113
    %v130 = vunpack.c.l.b16 %v114
    %v131 = vunpack.c.l.b16 %v115
    %v132 = vunpack.c.l.b16 %v116
    %v133 = vunpack.c.l.b16 %v117
    %v134 = vunpack.c.l.b16 %v118
    %v135 = vunpack.c.l.b16 %v119
    %v136 = vpack.c.b16 %v129, %v128
    %v137 = vpack.c.b16 %v131, %v130
    %v138 = vpack.c.b16 %v133, %v132
    %v139 = vpack.c.b16 %v135, %v134
    %v145 = vsel %vm63, %v111, 0
    %147 = vmatprep.subr.bf16.mxu0 0
    %148 = vmatpush1.bf16.msra.mxu0 0
    %149 = vmatprep.subr.bf16.mxu0 0
    %150 = vmatpush1.bf16.msra.mxu0 0
    %151 = vmatprep.subr.bf16.mxu0 0
    %152 = vmatpush1.bf16.msra.mxu0 0
    %153 = vmatprep.subr.bf16.mxu0 0
    %154 = vmatpush1.bf16.msra.mxu0 0
    %155 = vmatprep.subr.bf16.mxu0 0
    %156 = vmatpush1.bf16.msra.mxu0 %v139
    %157 = vmatprep.subr.bf16.mxu0 0
    %158 = vmatpush1.bf16.msra.mxu0 %v138
    %159 = vmatprep.subr.bf16.mxu0 0
    %160 = vmatpush1.bf16.msra.mxu0 %v137
    %161 = vmatprep.subr.bf16.mxu0 0
    %162 = vmatpush1.bf16.msra.mxu0 %v136
    %163 = vmatprep.subr.bf16.mxu0 0
    %164 = vmatpush2.bf16.msra.mxu0 0
    %165 = vmatprep.subr.bf16.mxu0 0
    %166 = vmatpush2.bf16.msra.mxu0 0
    %167 = vmatprep.subr.bf16.mxu0 0
    %168 = vmatpush2.bf16.msra.mxu0 0
    %169 = vmatprep.subr.bf16.mxu0 0
    %170 = vmatpush2.bf16.msra.mxu0 0
    %171 = vmatprep.subr.bf16.mxu0 0
    %172 = vmatpush2.bf16.msra.mxu0 0
    %173 = vmatprep.subr.bf16.mxu0 0
    %174 = vmatpush2.bf16.msra.mxu0 0
    %175 = vmatprep.subr.bf16.mxu0 0
    %176 = vmatpush2.bf16.msra.mxu0 0
    %177 = vmatprep.subr.bf16.mxu0 0
    %178 = vmatpush2.bf16.msra.mxu0 0
    %179 = vmatprep.mubr.bf16.mxu0 0
    %180 = vmatmul.mubr.bf16.gmra.mxu0 %v145
    %v181 = vpop.f32.mrf.mxu0
    %v182 = vadd.f32 0.0, %v181
    %v183 = vpop.f32.mrf.mxu0
    %v184 = vpop.f32.mrf.mxu0
    %v185 = vpop.f32.mrf.mxu0
    %186 = vdwg.mxu0
    %v187 = vadd.f32 %v110, %v182
    %188 = vst.msk [vmem:[#allocation3] sm:$0x3] %vm108, %v187
    // Predicated region
    $region22: #{tpu_custom_call.1} parent=1 // pred_check
      %p189 = pneg %p22
    $region23: #{tpu_custom_call.1} parent=1 // pred_check_branch
      %191 = sbr.rel (%p189) target = $region25
    $region24: #{tpu_custom_call.1} parent=1 // pred_region
      %v192 = vld [vmem:[#allocation2] sm:$0x3]
      %193 = vst.msk [vmem:[#allocation4] sm:$0x3] %vm108, %v192
      %v194 = vld [vmem:[#allocation3] sm:$0x3]
      %195 = vst.msk [vmem:[#allocation6] sm:$0x3] %vm108, %v194
    $region25: #{tpu_custom_call.1} parent=1 // pred_fallthru
      _
    // Predicated region
    $region26: #{tpu_custom_call.1} parent=1 // pred_check
      _
    $region27: #{tpu_custom_call.1} parent=1 // pred_check_branch
      %197 = sbr.rel (0) target = $region29
    $region28: #{tpu_custom_call.1} parent=1 // pred_region
      %s199 = ssub.s32 32, 32
      %200 = vsyncadd [#allocation5], %s199
      %s202 = sshll.u32 [#allocation4], 4
      %s203 = int_to_ptr.vmem [resolvable:$true] %s202
      %205 = dma.vmem_to_hbm [thread:$0]  %s203, 32, %s4, [#allocation5]
    $region29: #{tpu_custom_call.1} parent=1 // pred_fallthru
      _
    // Predicated region
    $region30: #{tpu_custom_call.1} parent=1 // pred_check
      _
    $region31: #{tpu_custom_call.1} parent=1 // pred_check_branch
      %207 = sbr.rel (0) target = $region33
    $region32: #{tpu_custom_call.1} parent=1 // pred_region
      %s209 = ssub.s32 32, 32
      %210 = vsyncadd [#allocation7], %s209
      %s212 = sshll.u32 [#allocation6], 4
      %s213 = int_to_ptr.vmem [resolvable:$true] %s212
      %215 = dma.vmem_to_hbm [thread:$0]  %s213, 32, %s5, [#allocation7]
    $region33: #{tpu_custom_call.1} parent=1 // pred_fallthru
      _
    // Predicated region
    $region34: #{tpu_custom_call.1} parent=1 // pred_check
      _
    $region35: #{tpu_custom_call.1} parent=1 // pred_check_branch
      %217 = sbr.rel (0) target = $region37
    $region36: #{tpu_custom_call.1} parent=1 // pred_region
      %218 = dma.done [#allocation5], 32
    $region37: #{tpu_custom_call.1} parent=1 // pred_fallthru
      _
    // Predicated region
    $region38: #{tpu_custom_call.1} parent=1 // pred_check
      _
    $region39: #{tpu_custom_call.1} parent=1 // pred_check_branch
      %220 = sbr.rel (0) target = $region41
    $region40: #{tpu_custom_call.1} parent=1 // pred_region
      %221 = dma.done [#allocation7], 32
    $region41: #{tpu_custom_call.1} parent=1 // pred_fallthru
      _
    %222 = vsyncpa [#allocation5], 1
    %223 = vsyncpa [#allocation7], 1

</llo_original>
